<compile_context>
chip_gen: v6e
topology: v6e:2x2x1
jax: 0.10.0
libtpu: 0.0.40
codegen_flags: <defaults>
</compile_context>

<pallas_src>
import functools

import jax
import jax.numpy as jnp
from jax.experimental import pallas as pl
from jax.experimental.pallas import tpu as pltpu

LANES = 128
ROW_ALIGN = 16   # row alignment of the 2D view (16 -> also valid for bf16 tiles)
MAX_TM = 2048    # rows per tile: 2048*128*4B = 1 MiB per input per buffer


def _focal_math(x, t, alpha, gamma):
    """Element-wise focal loss in f32. Shares one exp between BCE and sigmoid."""
    #   e       = exp(-|x|)
    #   bce     = max(x, 0) - x*t + log(1 + e)      (== BCEWithLogitsLoss)
    #   sigmoid = 1/(1+e)  if x >= 0,  e/(1+e)  if x < 0
    e = jnp.exp(-jnp.abs(x))
    bce = jnp.maximum(x, 0.0) - x * t + jnp.log(1.0 + e)
    r = 1.0 / (1.0 + e)
    probs = jnp.where(x >= 0.0, r, e * r)

    p_t = t * probs + (1.0 - t) * (1.0 - probs)
    u = 1.0 - p_t
    if float(gamma).is_integer() and 0.0 <= gamma <= 8.0:
        gi = int(gamma)
        focal = jnp.ones_like(u) if gi == 0 else u
        for _ in range(max(gi - 1, 0)):
            focal = focal * u              # gamma=2 -> u*u (no pow/exp/log)
    else:
        focal = u ** gamma
    alpha_factor = t * alpha + (1.0 - t) * (1.0 - alpha)
    return alpha_factor * focal * bce


def _focal_reduce_kernel(x_ref, t_ref, o_ref, acc_ref, *, alpha, gamma, total,
                         scale, tm, tiles_per_part, needs_mask):
    p = pl.program_id(0)            # part (megacore split)
    s = pl.program_id(1)            # serial tile index within the part

    @pl.when(s == 0)
    def _():
        acc_ref[...] = jnp.zeros_like(acc_ref)

    x = x_ref[...].astype(jnp.float32)
    t = t_ref[...].astype(jnp.float32)
    loss = _focal_math(x, t, alpha, gamma)

    def fold(v):
        # (tm, 128) -> (8, 128) via elementwise vreg adds (VPU only; the single
        # cross-lane reduction happens once in the finalize step below).
        return jnp.sum(v.reshape(-1, 8, LANES), axis=0)

    if not needs_mask:
        acc_ref[...] += fold(loss)
    else:
        # NOTE: int32 global-index math; valid for inputs < 2**31 elements.
        lin = p * tiles_per_part + s                  # logical tile index
        tile_start = lin * (tm * LANES)
        full = tile_start + tm * LANES <= total

        @pl.when(full)
        def _():
            acc_ref[...] += fold(loss)

        @pl.when(jnp.logical_not(full))
        def _():
            row = jax.lax.broadcasted_iota(jnp.int32, loss.shape, 0)
            col = jax.lax.broadcasted_iota(jnp.int32, loss.shape, 1)
            gidx = tile_start + row * LANES + col
            acc_ref[...] += fold(jnp.where(gidx < total, loss, 0.0))

    @pl.when(s == pl.num_programs(1) - 1)
    def _():
        o_ref[...] = jnp.sum(acc_ref[...], keepdims=True) * scale


def _focal_elem_kernel(x_ref, t_ref, o_ref, *, alpha, gamma):
    x = x_ref[...].astype(jnp.float32)
    t = t_ref[...].astype(jnp.float32)
    o_ref[...] = _focal_math(x, t, alpha, gamma).astype(o_ref.dtype)


def focal_loss(logits, targets, alpha=0.25, gamma=2.0, reduction="mean"):
    assert reduction in ("mean", "sum", "none")
    total = logits.size
    orig_shape = logits.shape
    out_dtype = logits.dtype

    # Keep the input dtype in HBM; the f32 cast happens inside the kernel
    # where it is free in VPU slack.
    x = jnp.ravel(logits)
    t = jnp.ravel(targets)

    chunk = ROW_ALIGN * LANES
    padded = pl.cdiv(total, chunk) * chunk
    pad = padded - total
    if pad:  # only materializes a copy when the size is not already aligned
        x = jnp.pad(x, (0, pad))
        t = jnp.pad(t, (0, pad))
    rows = padded // LANES
    x2 = x.reshape(rows, LANES)
    t2 = t.reshape(rows, LANES)

    tm = min(MAX_TM, rows)                     # multiple of 16 by construction

    if reduction == "none":
        rows_p = pl.cdiv(rows, tm) * tm
        if rows_p != rows:
            x2 = jnp.pad(x2, ((0, rows_p - rows), (0, 0)))
            t2 = jnp.pad(t2, ((0, rows_p - rows), (0, 0)))
        kernel = functools.partial(_focal_elem_kernel,
                                   alpha=float(alpha), gamma=float(gamma))
        out2 = pl.pallas_call(
            kernel,
            out_shape=jax.ShapeDtypeStruct((rows_p, LANES), out_dtype),
            grid_spec=pltpu.PrefetchScalarGridSpec(
                num_scalar_prefetch=0,
                grid=(rows_p // tm,),
                in_specs=[pl.BlockSpec((tm, LANES), lambda i: (i, 0)),
                          pl.BlockSpec((tm, LANES), lambda i: (i, 0))],
                out_specs=pl.BlockSpec((tm, LANES), lambda i: (i, 0)),
            ),
            compiler_params=pltpu.CompilerParams(
                dimension_semantics=("parallel",),
            ),
        )(x2, t2)
        return out2.reshape(-1)[:total].reshape(orig_shape)

    # ---- 'mean' / 'sum' reduction path ----
    n_tiles = pl.cdiv(rows, tm)
    n_parts = 2 if n_tiles >= 2 else 1         # 2-TC split on v7x; cheap elsewhere
    tiles_per_part = pl.cdiv(n_tiles, n_parts)

    # Masking is only needed when some tile can contain padded / out-of-range
    # elements; for aligned, evenly-splitting inputs it is compiled out.
    needs_mask = (pad != 0) or (rows % tm != 0) or (n_parts * tiles_per_part != n_tiles)

    scale = (1.0 / float(total)) if reduction == "mean" else 1.0
    kernel = functools.partial(
        _focal_reduce_kernel, alpha=float(alpha), gamma=float(gamma),
        total=int(total), scale=float(scale), tm=tm,
        tiles_per_part=tiles_per_part, needs_mask=needs_mask,
    )

    last_tile = n_tiles - 1

    def in_map(p, s):
        # Clamp so (p, s) combos past the last logical tile re-read a valid
        # tile; their contribution is masked to zero inside the kernel.
        return (jnp.minimum(p * tiles_per_part + s, last_tile), 0)

    partials = pl.pallas_call(
        kernel,
        out_shape=jax.ShapeDtypeStruct((n_parts, 1), jnp.float32),
        grid_spec=pltpu.PrefetchScalarGridSpec(
            num_scalar_prefetch=0,
            grid=(n_parts, tiles_per_part),
            in_specs=[
                pl.BlockSpec((tm, LANES), in_map),
                pl.BlockSpec((tm, LANES), in_map),
            ],
            out_specs=pl.BlockSpec((1, 1), lambda p, s: (p, 0)),
            scratch_shapes=[pltpu.VMEM((8, LANES), jnp.float32)],
        ),
        compiler_params=pltpu.CompilerParams(
            dimension_semantics=("parallel", "arbitrary"),
        ),
    )(x2, t2)
    return jnp.sum(partials)


def focal_loss_ref(logits, targets, alpha=0.25, gamma=2.0, reduction="mean"):
    x = logits.astype(jnp.float32)
    t = targets.astype(jnp.float32)
    bce = jnp.maximum(x, 0.0) - x * t + jnp.log1p(jnp.exp(-jnp.abs(x)))
    probs = jax.nn.sigmoid(x)
    p_t = t * probs + (1.0 - t) * (1.0 - probs)
    loss = (t * alpha + (1.0 - t) * (1.0 - alpha)) * (1.0 - p_t) ** gamma * bce
    if reduction == "mean":
        return jnp.mean(loss)
    if reduction == "sum":
        return jnp.sum(loss)
    return loss


if __name__ == "__main__":
    key = jax.random.PRNGKey(0)
    k1, k2 = jax.random.split(key)
    # NCHW logits/targets, as a typical binary-segmentation head would emit.
    logits = jax.random.normal(k1, (2, 4, 16, 16), dtype=jnp.float32)
    targets = jax.random.bernoulli(k2, 0.3, (2, 4, 16, 16)).astype(jnp.float32)

    out_mean = focal_loss(logits, targets, alpha=0.25, gamma=2.0, reduction="mean")
    out_sum = focal_loss(logits, targets, alpha=0.25, gamma=2.0, reduction="sum")
    out_none = focal_loss(logits, targets, alpha=0.25, gamma=2.0, reduction="none")
    jax.block_until_ready((out_mean, out_sum, out_none))

    ref_mean = focal_loss_ref(logits, targets, reduction="mean")
    ref_sum = focal_loss_ref(logits, targets, reduction="sum")
    ref_none = focal_loss_ref(logits, targets, reduction="none")

    assert jnp.allclose(out_mean, ref_mean, rtol=1e-5, atol=1e-5), (out_mean, ref_mean)
    assert jnp.allclose(out_sum, ref_sum, rtol=1e-5, atol=1e-4), (out_sum, ref_sum)
    assert jnp.allclose(out_none, ref_none, rtol=1e-5, atol=1e-5)
    print("KERNEL_OK")
</pallas_src>

<mosaic_0001>
module attributes {stable_mosaic.version = 11 : i64} {
  func.func @_focal_reduce_kernel(%arg0: i32, %arg1: i32, %arg2: memref<16x128xf32, #tpu.memory_space<vmem>>, %arg3: memref<16x128xf32, #tpu.memory_space<vmem>>, %arg4: memref<1x1xf32, #tpu.memory_space<vmem>>, %arg5: memref<8x128xf32, #tpu.memory_space<vmem>>) attributes {dimension_semantics = [#tpu.dimension_semantics<parallel>, #tpu.dimension_semantics<arbitrary>], iteration_bounds = array<i64: 1, 1>, scalar_prefetch = 0 : i64, scratch_operands = 1 : i64, tpu.core_type = #tpu.core_type<tc>, window_params = [{transform_indices = @transform_0, window_bounds = array<i64: 16, 128>}, {transform_indices = @transform_1, window_bounds = array<i64: 16, 128>}, {transform_indices = @transform_2, window_bounds = array<i64: 1, 1>}]} {
    %c0_i32 = arith.constant 0 : i32
    %0 = arith.cmpi eq, %arg1, %c0_i32 : i32
    %1 = arith.extui %0 : i1 to i32
    %c0_i32_0 = arith.constant 0 : i32
    %2 = arith.cmpi ne, %1, %c0_i32_0 : i32
    scf.if %2 {
      %cst_22 = arith.constant 0.000000e+00 : f32
      %52 = vector.broadcast %cst_22 : f32 to vector<8x128xf32>
      %c0_23 = arith.constant 0 : index
      %c0_24 = arith.constant 0 : index
      %53 = vector.load %arg5[%c0_23, %c0_24] : memref<8x128xf32, #tpu.memory_space<vmem>>, vector<8x128xf32>
      tpu.vector_store %arg5[%c0_23, %c0_24], %52 {strides = array<i32>} : memref<8x128xf32, #tpu.memory_space<vmem>>, vector<8x128xf32>,
    } else {
    }
    %c0 = arith.constant 0 : index
    %c0_1 = arith.constant 0 : index
    %3 = vector.load %arg2[%c0, %c0_1] : memref<16x128xf32, #tpu.memory_space<vmem>>, vector<16x128xf32>
    %c0_2 = arith.constant 0 : index
    %c0_3 = arith.constant 0 : index
    %4 = vector.load %arg3[%c0_2, %c0_3] : memref<16x128xf32, #tpu.memory_space<vmem>>, vector<16x128xf32>
    %5 = math.absf %3 : vector<16x128xf32>
    %cst = arith.constant 0.000000e+00 : f32
    %6 = vector.broadcast %cst : f32 to vector<16x128xf32>
    %7 = arith.subf %6, %5 : vector<16x128xf32>
    %8 = math.exp %7 : vector<16x128xf32>
    %cst_4 = arith.constant 0.000000e+00 : f32
    %9 = vector.broadcast %cst_4 : f32 to vector<16x128xf32>
    %10 = arith.maximumf %3, %9 : vector<16x128xf32>
    %11 = arith.mulf %3, %4 : vector<16x128xf32>
    %12 = arith.subf %10, %11 : vector<16x128xf32>
    %cst_5 = arith.constant 1.000000e+00 : f32
    %13 = vector.broadcast %cst_5 : f32 to vector<16x128xf32>
    %14 = arith.addf %13, %8 : vector<16x128xf32>
    %15 = math.log %14 : vector<16x128xf32>
    %16 = arith.addf %12, %15 : vector<16x128xf32>
    %cst_6 = arith.constant 1.000000e+00 : f32
    %17 = vector.broadcast %cst_6 : f32 to vector<16x128xf32>
    %18 = arith.addf %17, %8 : vector<16x128xf32>
    %cst_7 = arith.constant 1.000000e+00 : f32
    %19 = vector.broadcast %cst_7 : f32 to vector<16x128xf32>
    %20 = arith.divf %19, %18 : vector<16x128xf32>
    %cst_8 = arith.constant 0.000000e+00 : f32
    %21 = vector.broadcast %cst_8 : f32 to vector<16x128xf32>
    %22 = arith.cmpf oge, %3, %21 : vector<16x128xf32>
    %23 = arith.mulf %8, %20 : vector<16x128xf32>
    %24 = arith.select %22, %20, %23 : vector<16x128xi1>, vector<16x128xf32>
    %25 = arith.mulf %4, %24 : vector<16x128xf32>
    %cst_9 = arith.constant 1.000000e+00 : f32
    %26 = vector.broadcast %cst_9 : f32 to vector<16x128xf32>
    %27 = arith.subf %26, %4 : vector<16x128xf32>
    %cst_10 = arith.constant 1.000000e+00 : f32
    %28 = vector.broadcast %cst_10 : f32 to vector<16x128xf32>
    %29 = arith.subf %28, %24 : vector<16x128xf32>
    %30 = arith.mulf %27, %29 : vector<16x128xf32>
    %31 = arith.addf %25, %30 : vector<16x128xf32>
    %cst_11 = arith.constant 1.000000e+00 : f32
    %32 = vector.broadcast %cst_11 : f32 to vector<16x128xf32>
    %33 = arith.subf %32, %31 : vector<16x128xf32>
    %34 = arith.mulf %33, %33 : vector<16x128xf32>
    %cst_12 = arith.constant 2.500000e-01 : f32
    %35 = vector.broadcast %cst_12 : f32 to vector<16x128xf32>
    %36 = arith.mulf %4, %35 : vector<16x128xf32>
    %cst_13 = arith.constant 1.000000e+00 : f32
    %37 = vector.broadcast %cst_13 : f32 to vector<16x128xf32>
    %38 = arith.subf %37, %4 : vector<16x128xf32>
    %cst_14 = arith.constant 7.500000e-01 : f32
    %39 = vector.broadcast %cst_14 : f32 to vector<16x128xf32>
    %40 = arith.mulf %38, %39 : vector<16x128xf32>
    %41 = arith.addf %36, %40 : vector<16x128xf32>
    %42 = arith.mulf %41, %34 : vector<16x128xf32>
    %43 = arith.mulf %42, %16 : vector<16x128xf32>
    %c0_15 = arith.constant 0 : index
    %c0_16 = arith.constant 0 : index
    %44 = vector.load %arg5[%c0_15, %c0_16] : memref<8x128xf32, #tpu.memory_space<vmem>>, vector<8x128xf32>
    %45 = vector.shape_cast %43 : vector<16x128xf32> to vector<2x8x128xf32>
    %cst_17 = arith.constant dense<0.000000e+00> : vector<8x128xf32>
    %46 = vector.multi_reduction <add>, %45, %cst_17 [0] : vector<2x8x128xf32> to vector<8x128xf32>
    %47 = arith.addf %44, %46 : vector<8x128xf32>
    %c0_18 = arith.constant 0 : index
    %c0_19 = arith.constant 0 : index
    %48 = vector.load %arg5[%c0_18, %c0_19] : memref<8x128xf32, #tpu.memory_space<vmem>>, vector<8x128xf32>
    tpu.vector_store %arg5[%c0_18, %c0_19], %47 {strides = array<i32>} : memref<8x128xf32, #tpu.memory_space<vmem>>, vector<8x128xf32>,
    %c0_i32_20 = arith.constant 0 : i32
    %49 = arith.cmpi eq, %arg1, %c0_i32_20 : i32
    %50 = arith.extui %49 : i1 to i32
    %c0_i32_21 = arith.constant 0 : i32
    %51 = arith.cmpi ne, %50, %c0_i32_21 : i32
    scf.if %51 {
      %c0_22 = arith.constant 0 : index
      %c0_23 = arith.constant 0 : index
      %52 = vector.load %arg5[%c0_22, %c0_23] : memref<8x128xf32, #tpu.memory_space<vmem>>, vector<8x128xf32>
      %53 = vector.shape_cast %52 : vector<8x128xf32> to vector<1x8x128xf32>
      %cst_24 = arith.constant dense<0.000000e+00> : vector<1xf32>
      %54 = vector.multi_reduction <add>, %53, %cst_24 [1, 2] : vector<1x8x128xf32> to vector<1xf32>
      %55 = vector.shape_cast %54 : vector<1xf32> to vector<1x1x1xf32>
      %56 = vector.extract %55[0, 0, 0] : f32 from vector<1x1x1xf32>
      %57 = vector.broadcast %56 : f32 to vector<1x1xf32>
      %cst_25 = arith.constant 4.8828125E-4 : f32
      %58 = vector.broadcast %cst_25 : f32 to vector<1x1xf32>
      %59 = arith.mulf %57, %58 : vector<1x1xf32>
      %c0_26 = arith.constant 0 : index
      %c0_27 = arith.constant 0 : index
      %60 = vector.load %arg4[%c0_26, %c0_27] : memref<1x1xf32, #tpu.memory_space<vmem>>, vector<1x1xf32>
      tpu.vector_store %arg4[%c0_26, %c0_27], %59 {strides = array<i32>} : memref<1x1xf32, #tpu.memory_space<vmem>>, vector<1x1xf32>,
    } else {
    }
    return
  }
  func.func @transform_0(%arg0: i32, %arg1: i32) -> (i32, i32) {
    %c1_i32 = arith.constant 1 : i32
    %0 = arith.muli %arg0, %c1_i32 : i32
    %1 = arith.addi %0, %arg1 : i32
    %c0_i32 = arith.constant 0 : i32
    %2 = arith.minsi %1, %c0_i32 : i32
    %c0_i32_0 = arith.constant 0 : i32
    %c0_i32_1 = arith.constant 0 : i32
    return %2, %c0_i32_0 : i32, i32
  }
  func.func @transform_1(%arg0: i32, %arg1: i32) -> (i32, i32) {
    %c1_i32 = arith.constant 1 : i32
    %0 = arith.muli %arg0, %c1_i32 : i32
    %1 = arith.addi %0, %arg1 : i32
    %c0_i32 = arith.constant 0 : i32
    %2 = arith.minsi %1, %c0_i32 : i32
    %c0_i32_0 = arith.constant 0 : i32
    %c0_i32_1 = arith.constant 0 : i32
    return %2, %c0_i32_0 : i32, i32
  }
  func.func @transform_2(%arg0: i32, %arg1: i32) -> (i32, i32) {
    %c0_i32 = arith.constant 0 : i32
    %c0_i32_0 = arith.constant 0 : i32
    return %arg0, %c0_i32 : i32, i32
  }
}

</mosaic_0001>

<llo_original>
// kernel: tpu_custom_call.1
$region0: #{tpu_custom_call.1}
  #allocation0 [shape = 'u32[]', space=smem, size = 0x4, offset = 0x4, fixed_abs, tag = 'smem constant byte address 0x4 - core index']
  #allocation1 [shape = 'u32[144,128]{1,0:T(1,128)}', space=vmem, size = 0x12000, scoped, tag = 'internal scratch']
  #allocation2 [shape = 'f32[8,128]{1,0:T(8,128)}', space=vmem, size = 0x1000, scoped, tag = 'scratch operand']
  %s0 = inlined_call_operand.hbm [shape: f32[16,128], index: 0, kind: input, shape index: {}]
  %s1 = inlined_call_operand.hbm [shape: f32[16,128], index: 1, kind: input, shape index: {}]
  %s2 = inlined_call_operand.hbm [shape: f32[1,1], index: 2, kind: output, shape index: {}]
  %s3 = sld [smem:[#allocation0]]
  $region34: #{tpu_custom_call.1} parent=0
    _
  %s5 = ssub.s32 1, %s3
  %s6 = scalar_select 0, %s5, %s3
  $region1: #{tpu_custom_call.1} parent=0
    #allocation3 [shape = 'u8[8192]{0}', space=vmem, size = 0x2000, scoped, tag = 'input window, operand 0, single buffered']
    #allocation4 [shape = 's32[1]{0}', space=sflag, size = 0x4, scoped, tag = 'scoped memory for tpu_custom_call.1']
    #allocation5 [shape = 's32[1]{0}', space=sflag, size = 0x4, scoped, tag = 'scoped memory for tpu_custom_call.1']
    #allocation6 [shape = 'u8[8192]{0}', space=vmem, size = 0x2000, scoped, tag = 'input window, operand 1, single buffered']
    #allocation7 [shape = 's32[1]{0}', space=sflag, size = 0x4, scoped, tag = 'scoped memory for tpu_custom_call.1']
    #allocation8 [shape = 'u8[512]{0}', space=vmem, size = 0x400, scoped, tag = 'output window, operand 0, single buffered']
    %7 = vsyncpa [#allocation4], 0
    %8 = vsyncpa [#allocation7], 0
    %9 = vsyncpa [#allocation5], 0
    // Predicated region
    $region2: #{tpu_custom_call.1} parent=1 // pred_check
      _
    $region3: #{tpu_custom_call.1} parent=1 // pred_check_branch
      %11 = sbr.rel (0) target = $region5
    $region4: #{tpu_custom_call.1} parent=1 // pred_region
      %s12 = sadd.s32 0, 0
      %p13 = scmp.lt.s32.totalorder %s12, 0
      %s14 = scalar_select %p13, %s12, 0
      %s15 = smul.u32 2, %s14
      %s17 = ssub.s32 256, 256
      %18 = vsyncadd [#allocation4], %s17
      %s19 = smul.addr %s15, 128
      %s20 = scalar_lea.hbm %s0, %s19
      %s21 = sshll.u32 [#allocation3], 4
      %s22 = int_to_ptr.vmem [resolvable:$true] %s21
      %27 = dma.hbm_to_vmem [thread:$0]  %s20, 256, %s22, [#allocation4], 128, 128, 8
    $region5: #{tpu_custom_call.1} parent=1 // pred_fallthru
      _
    // Predicated region
    $region6: #{tpu_custom_call.1} parent=1 // pred_check
      _
    $region7: #{tpu_custom_call.1} parent=1 // pred_check_branch
      %29 = sbr.rel (0) target = $region9
    $region8: #{tpu_custom_call.1} parent=1 // pred_region
      %s30 = sadd.s32 0, 0
      %p31 = scmp.lt.s32.totalorder %s30, 0
      %s32 = scalar_select %p31, %s30, 0
      %s33 = smul.u32 2, %s32
      %s35 = ssub.s32 256, 256
      %36 = vsyncadd [#allocation7], %s35
      %s37 = smul.addr %s33, 128
      %s38 = scalar_lea.hbm %s1, %s37
      %s39 = sshll.u32 [#allocation6], 4
      %s40 = int_to_ptr.vmem [resolvable:$true] %s39
      %45 = dma.hbm_to_vmem [thread:$0]  %s38, 256, %s40, [#allocation7], 128, 128, 8
    $region9: #{tpu_custom_call.1} parent=1 // pred_fallthru
      _
    // Predicated region
    $region10: #{tpu_custom_call.1} parent=1 // pred_check
      _
    $region11: #{tpu_custom_call.1} parent=1 // pred_check_branch
      %47 = sbr.rel (0) target = $region13
    $region12: #{tpu_custom_call.1} parent=1 // pred_region
      %48 = dma.done [#allocation4], 256
    $region13: #{tpu_custom_call.1} parent=1 // pred_fallthru
      _
    // Predicated region
    $region14: #{tpu_custom_call.1} parent=1 // pred_check
      _
    $region15: #{tpu_custom_call.1} parent=1 // pred_check_branch
      %50 = sbr.rel (0) target = $region17
    $region16: #{tpu_custom_call.1} parent=1 // pred_region
      %51 = dma.done [#allocation7], 256
    $region17: #{tpu_custom_call.1} parent=1 // pred_fallthru
      _
    %s52 = sadd.s32 0, 0
    %p53 = scmp.lt.s32.totalorder %s52, 0
    %s54 = scalar_select %p53, %s52, 0
    %s55 = smul.u32 2, %s54
    %s56 = sadd.s32 0, 0
    %p57 = scmp.lt.s32.totalorder %s56, 0
    %s58 = scalar_select %p57, %s56, 0
    %s59 = smul.u32 2, %s58
    %p60 = scmp.eq.s32.totalorder 0, 0
    // Predicated region
    $region18: #{tpu_custom_call.1} parent=1 // pred_check
      %p61 = pneg %p60
    $region19: #{tpu_custom_call.1} parent=1 // pred_check_branch
      %63 = sbr.rel (%p61) target = $region21
    $region20: #{tpu_custom_call.1} parent=1 // pred_region
      %64 = vst [vmem:[#allocation2] sm:$0xff] 0.0
    $region21: #{tpu_custom_call.1} parent=1 // pred_fallthru
      _
    %v65 = vld [vmem:[#allocation3] sm:$0xff]
    %v66 = vld [vmem:[#allocation3 + $0x8] sm:$0xff]
    %v67 = vld [vmem:[#allocation6] sm:$0xff]
    %v68 = vld [vmem:[#allocation6 + $0x8] sm:$0xff]
    %v69 = vand.u32 2147483647, %v65
    %v70 = vand.u32 2147483647, %v66
    %v71 = vsub.f32 0.0, %v69
    %v72 = vsub.f32 0.0, %v70
    %v73 = vmul.f32 %v71, 1.442695
    %v74 = vpow.pop %v73
    %v75 = vmul.f32 %v72, 1.442695
    %v76 = vpow.pop %v75
    %v77 = vmax.f32 %v65, 0.0
    %v78 = vmax.f32 %v66, 0.0
    %v79 = vmul.f32 %v65, %v67
    %v80 = vmul.f32 %v66, %v68
    %v81 = vsub.f32 %v77, %v79
    %v82 = vsub.f32 %v78, %v80
    %v83 = vadd.f32 %v74, 1.0
    %v84 = vadd.f32 %v76, 1.0
    %v85 = vlog2.pop %v83
    %v86 = vmul.f32 %v85, 0.6931472
    %v87 = vlog2.pop %v84
    %v88 = vmul.f32 %v87, 0.6931472
    %v89 = vadd.f32 %v81, %v86
    %v90 = vadd.f32 %v82, %v88
    %v91 = vrcp.pop %v83
    %v92 = vmul.f32 1.0, %v91
    %v93 = vrcp.pop %v84
    %v94 = vmul.f32 1.0, %v93
    %vm95 = vcmp.ge.f32.partialorder %v65, 0.0
    %vm96 = vcmp.ge.f32.partialorder %v66, 0.0
    %v97 = vmul.f32 %v74, %v92
    %v98 = vmul.f32 %v76, %v94
    %v99 = vsel %vm95, %v92, %v97
    %v100 = vsel %vm96, %v94, %v98
    %v101 = vmul.f32 %v67, %v99
    %v102 = vmul.f32 %v68, %v100
    %v103 = vsub.f32 1.0, %v67
    %v104 = vsub.f32 1.0, %v68
    %v105 = vsub.f32 1.0, %v99
    %v106 = vsub.f32 1.0, %v100
    %v107 = vmul.f32 %v103, %v105
    %v108 = vmul.f32 %v104, %v106
    %v109 = vadd.f32 %v101, %v107
    %v110 = vadd.f32 %v102, %v108
    %v111 = vsub.f32 1.0, %v109
    %v112 = vsub.f32 1.0, %v110
    %v113 = vmul.f32 %v111, %v111
    %v114 = vmul.f32 %v112, %v112
    %v115 = vmul.f32 %v67, 0.25
    %v116 = vmul.f32 %v68, 0.25
    %v117 = vmul.f32 %v103, 0.75
    %v118 = vmul.f32 %v104, 0.75
    %v119 = vadd.f32 %v115, %v117
    %v120 = vadd.f32 %v116, %v118
    %v121 = vmul.f32 %v119, %v113
    %v122 = vmul.f32 %v120, %v114
    %v123 = vmul.f32 %v121, %v89
    %v124 = vmul.f32 %v122, %v90
    %v125 = vld [vmem:[#allocation2] sm:$0xff]
    %v126 = vadd.f32 %v123, %v124
    %v127 = vadd.f32 %v125, %v126
    %128 = vst [vmem:[#allocation2] sm:$0xff] %v127
    // Predicated region
    $region22: #{tpu_custom_call.1} parent=1 // pred_check
      %p129 = pneg %p60
    $region23: #{tpu_custom_call.1} parent=1 // pred_check_branch
      %131 = sbr.rel (%p129) target = $region25
    $region24: #{tpu_custom_call.1} parent=1 // pred_region
      %v132 = vld [vmem:[#allocation2] sm:$0xff]
      %133 = vadd.xlane.f32.xlu0 %v132
      %v134 = vpop.xlane.xlu0 %133
      %v135 = vrot.slane %v134, 4
      %v136 = vadd.f32 %v134, %v135
      %v137 = vrot.slane %v136, 2
      %v138 = vadd.f32 %v136, %v137
      %v139 = vrot.slane %v138, 1
      %v140 = vadd.f32 %v138, %v139
      %s141 = vtos %v140
      %v142 = vstv %s141
      %v143 = vmul.f32 %v142, 0.00048828125
      %vm144 = vcmask 0
      %145 = vst.msk [vmem:[#allocation8] sm:$0x1] %vm144, %v143
    $region25: #{tpu_custom_call.1} parent=1 // pred_fallthru
      _
    // Predicated region
    $region26: #{tpu_custom_call.1} parent=1 // pred_check
      _
    $region27: #{tpu_custom_call.1} parent=1 // pred_check_branch
      %147 = sbr.rel (0) target = $region29
    $region28: #{tpu_custom_call.1} parent=1 // pred_region
      %s149 = ssub.s32 16, 16
      %150 = vsyncadd [#allocation5], %s149
      %s152 = sshll.u32 [#allocation8], 4
      %s153 = int_to_ptr.vmem [resolvable:$true] %s152
      %155 = dma.vmem_to_hbm [thread:$0]  %s153, 16, %s2, [#allocation5]
    $region29: #{tpu_custom_call.1} parent=1 // pred_fallthru
      _
    // Predicated region
    $region30: #{tpu_custom_call.1} parent=1 // pred_check
      _
    $region31: #{tpu_custom_call.1} parent=1 // pred_check_branch
      %157 = sbr.rel (0) target = $region33
    $region32: #{tpu_custom_call.1} parent=1 // pred_region
      %158 = dma.done [#allocation5], 16
    $region33: #{tpu_custom_call.1} parent=1 // pred_fallthru
      _
    %159 = vsyncpa [#allocation4], 1
    %160 = vsyncpa [#allocation7], 1
    %161 = vsyncpa [#allocation5], 1

</llo_original>
